<compile_context>
chip_gen: v7x
topology: tpu7x:2x2x1
jax: 0.10.0
libtpu: 0.0.40
codegen_flags: <defaults>
</compile_context>

<pallas_src>
import functools

import numpy as np
import jax
import jax.numpy as jnp
from jax.experimental import pallas as pl
from jax.experimental.pallas import tpu as pltpu


def _build_pe_table(max_len: int, d_model: int) -> jnp.ndarray:
    """Sinusoidal positional-encoding table, shape [max_len, d_model] (f32)."""
    position = np.arange(0, max_len, dtype=np.float32)[:, None]            # [max_len, 1]
    div_term = np.exp(np.arange(0, d_model, 2, dtype=np.float32)
                      * (-np.log(10000.0) / d_model))                       # [ceil(d/2)]
    pe = np.zeros((max_len, d_model), dtype=np.float32)
    pe[:, 0::2] = np.sin(position * div_term)
    pe[:, 1::2] = np.cos(position * div_term)[:, : d_model // 2]            # odd-d_model safe
    return jnp.asarray(pe)


def _round_up(n: int, m: int) -> int:
    return (n + m - 1) // m * m


def _sublane_multiple(dtype) -> int:
    """Packed-sublane row granularity: 8 for 4-byte, 16 for 2-byte, 32 for 1-byte."""
    return max(8, 32 // jnp.dtype(dtype).itemsize)


def _vmem_params():
    """(vmem_budget_bytes, vmem_limit_bytes, multi_tensorcore) for this chip."""
    phys = 64 << 20  # conservative default (v7x-class) if the query fails
    try:
        info = pltpu.get_tpu_info()
        phys = int(getattr(info, "vmem_capacity_bytes", phys))
    except Exception:
        pass
    if phys <= (64 << 20):
        # v7x-class: 64 MiB VMEM per TC, 2 TCs share the HBM stream.
        return 24 << 20, 48 << 20, True
    # v5e / v6e class: 128 MiB VMEM, single TensorCore.
    return 64 << 20, 100 << 20, False


def _choose_block_rows(seq_len: int, *, x_row_bytes: int, pe_row_bytes: int,
                       sublane: int, vmem_budget: int, multi_tc: bool) -> int:
    """Sublane-aligned seq tile sized against the per-generation VMEM budget."""
    s_al = _round_up(seq_len, sublane)
    # Resident per tile row: double-buffered x-in + x-out, double-buffered pe.
    per_row = 4 * x_row_bytes + 2 * pe_row_bytes
    cap = max(sublane, (vmem_budget // max(per_row, 1)) // sublane * sublane)
    ts = min(s_al, cap)
    if multi_tc and s_al > sublane:
        # Keep >= 2 grid steps so both TensorCores get a share of the stream.
        ts = min(ts, _round_up(pl.cdiv(seq_len, 2), sublane))
    return max(sublane, ts)


def _pe_add_kernel(x_ref, pe_ref, o_ref, *, batch: int, d_model: int):
    # x_ref / o_ref : (ts, B*D) lane-dense tile of the flattened activations
    # pe_ref        : (ts, D)   matching seq-window of the positional table
    pe = pe_ref[...]
    if pe.dtype != x_ref.dtype:
        pe = pe.astype(x_ref.dtype)        # per-tile cast; no full-table XLA pass
    # Batch broadcast via B static ref-view adds (no VMEM concat temp).
    for b in range(batch):
        lo = b * d_model
        o_ref[:, lo:lo + d_model] = x_ref[:, lo:lo + d_model] + pe


def positional_encoding_forward(x: jnp.ndarray, pe_table: jnp.ndarray) -> jnp.ndarray:
    """x: [S, B, D]; pe_table: [max_len, D] (f32). Returns x + pe[:S] (eval-mode dropout)."""
    S, B, D = x.shape
    max_len, d_pe = pe_table.shape
    assert d_pe == D, "pe table width must match d_model"
    assert max_len >= S, "sequence length exceeds positional-encoding table"

    x_flat = x.reshape(S, B * D)                  # free row-major reshape, lane-dense rows
    itemsize = jnp.dtype(x.dtype).itemsize
    pe_itemsize = jnp.dtype(pe_table.dtype).itemsize

    sublane = _sublane_multiple(x.dtype)
    vmem_budget, vmem_limit, multi_tc = _vmem_params()
    ts = _choose_block_rows(
        S,
        x_row_bytes=(B * D) * itemsize,
        pe_row_bytes=D * pe_itemsize,
        sublane=sublane,
        vmem_budget=vmem_budget,
        multi_tc=multi_tc,
    )
    grid = (pl.cdiv(S, ts),)

    cost = pl.CostEstimate(
        flops=S * B * D,
        transcendentals=0,
        bytes_accessed=2 * S * B * D * itemsize + S * D * pe_itemsize,
    )

    out_flat = pl.pallas_call(
        functools.partial(_pe_add_kernel, batch=B, d_model=D),
        out_shape=jax.ShapeDtypeStruct((S, B * D), x.dtype),
        grid_spec=pltpu.PrefetchScalarGridSpec(
            num_scalar_prefetch=0,
            grid=grid,
            in_specs=[
                pl.BlockSpec((ts, B * D), lambda i: (i, 0)),   # x tile
                pl.BlockSpec((ts, D), lambda i: (i, 0)),       # pe seq-window of the full table
            ],
            out_specs=pl.BlockSpec((ts, B * D), lambda i: (i, 0)),
        ),
        input_output_aliases={0: 0},               # let callers donate x
        cost_estimate=cost,
        compiler_params=pltpu.CompilerParams(
            dimension_semantics=("parallel",),
            vmem_limit_bytes=vmem_limit,
        ),
    )(x_flat, pe_table)

    return out_flat.reshape(S, B, D)


if __name__ == "__main__":
    d_model = 32
    max_len = 5000
    seq_len = 8
    batch = 2

    key = jax.random.PRNGKey(0)
    x = jax.random.normal(key, (seq_len, batch, d_model), dtype=jnp.float32)

    pe_table = _build_pe_table(max_len, d_model)

    # Reference computed (and materialized) before the kernel call so the
    # aliasable/donatable input can never affect the comparison.
    ref = jax.block_until_ready(x + pe_table[:seq_len][:, None, :])

    out = jax.block_until_ready(positional_encoding_forward(x, pe_table))

    assert out.shape == (seq_len, batch, d_model)
    assert jnp.allclose(out, ref, atol=1e-6), "mismatch vs reference"

    print("KERNEL_OK")
</pallas_src>

<mosaic_0001>
module attributes {stable_mosaic.version = 11 : i64} {
  func.func @_pe_add_kernel(%arg0: i32, %arg1: memref<8x64xf32, #tpu.memory_space<vmem>>, %arg2: memref<8x32xf32, #tpu.memory_space<vmem>>, %arg3: memref<8x64xf32, #tpu.memory_space<vmem>>) attributes {dimension_semantics = [#tpu.dimension_semantics<parallel>], iteration_bounds = array<i64: 1>, scalar_prefetch = 0 : i64, scratch_operands = 0 : i64, tpu.core_type = #tpu.core_type<tc>, window_params = [{transform_indices = @transform_0, window_bounds = array<i64: 8, 64>}, {transform_indices = @transform_1, window_bounds = array<i64: 8, 32>}, {transform_indices = @transform_2, window_bounds = array<i64: 8, 64>}]} {
    %c0 = arith.constant 0 : index
    %c0_0 = arith.constant 0 : index
    %0 = vector.load %arg2[%c0, %c0_0] : memref<8x32xf32, #tpu.memory_space<vmem>>, vector<8x32xf32>
    %c0_1 = arith.constant 0 : index
    %c0_2 = arith.constant 0 : index
    %1 = vector.load %arg1[%c0_1, %c0_2] : memref<8x64xf32, #tpu.memory_space<vmem>>, vector<8x32xf32>
    %2 = arith.addf %1, %0 : vector<8x32xf32>
    %c0_3 = arith.constant 0 : index
    %c0_4 = arith.constant 0 : index
    %3 = vector.load %arg3[%c0_3, %c0_4] : memref<8x64xf32, #tpu.memory_space<vmem>>, vector<8x32xf32>
    tpu.vector_store %arg3[%c0_3, %c0_4], %2 {strides = array<i32>} : memref<8x64xf32, #tpu.memory_space<vmem>>, vector<8x32xf32>,
    %c0_5 = arith.constant 0 : index
    %c32 = arith.constant 32 : index
    %4 = vector.load %arg1[%c0_5, %c32] : memref<8x64xf32, #tpu.memory_space<vmem>>, vector<8x32xf32>
    %5 = arith.addf %4, %0 : vector<8x32xf32>
    %c0_6 = arith.constant 0 : index
    %c32_7 = arith.constant 32 : index
    %6 = vector.load %arg3[%c0_6, %c32_7] : memref<8x64xf32, #tpu.memory_space<vmem>>, vector<8x32xf32>
    tpu.vector_store %arg3[%c0_6, %c32_7], %5 {strides = array<i32>} : memref<8x64xf32, #tpu.memory_space<vmem>>, vector<8x32xf32>,
    return
  }
  func.func @transform_0(%arg0: i32) -> (i32, i32) {
    %c0_i32 = arith.constant 0 : i32
    %c0_i32_0 = arith.constant 0 : i32
    return %arg0, %c0_i32 : i32, i32
  }
  func.func @transform_1(%arg0: i32) -> (i32, i32) {
    %c0_i32 = arith.constant 0 : i32
    %c0_i32_0 = arith.constant 0 : i32
    return %arg0, %c0_i32 : i32, i32
  }
  func.func @transform_2(%arg0: i32) -> (i32, i32) {
    %c0_i32 = arith.constant 0 : i32
    %c0_i32_0 = arith.constant 0 : i32
    return %arg0, %c0_i32 : i32, i32
  }
}

</mosaic_0001>

<llo_original>
// kernel: tpu_custom_call.1
$region0: #{tpu_custom_call.1}
  #allocation0 [shape = 'u32[]', space=smem, size = 0x4, offset = 0x4, fixed_abs, tag = 'smem constant byte address 0x4 - core index']
  #allocation1 [shape = 'u32[144,128]{1,0:T(1,128)}', space=vmem, size = 0x12000, scoped, tag = 'internal scratch']
  %s0 = inlined_call_operand.hbm [shape: f32[8,64], index: 0, kind: input, shape index: {}, may-alias: {0,2}]
  %s1 = inlined_call_operand.vmem [shape: f32[5000,32], index: 1, kind: input, shape index: {}]
  %s2 = inlined_call_operand.hbm [shape: f32[8,64], index: 2, kind: output, shape index: {}, may-alias: {0,2}]
  %s3 = sld [smem:[#allocation0]]
  $region22: #{tpu_custom_call.1} parent=0
    _
  %s5 = ssub.s32 1, %s3
  %s6 = scalar_select 0, %s5, %s3
  $region1: #{tpu_custom_call.1} parent=0
    #allocation2 [shape = 'u8[4096]{0}', space=vmem, size = 0x1000, scoped, tag = 'input window, operand 0, single buffered']
    #allocation3 [shape = 's32[1]{0}', space=sflag, size = 0x4, scoped, tag = 'scoped memory for tpu_custom_call.1']
    #allocation4 [shape = 's32[1]{0}', space=sflag, size = 0x4, scoped, tag = 'scoped memory for tpu_custom_call.1']
    #allocation5 [shape = 'u8[4096]{0}', space=vmem, size = 0x1000, scoped, tag = 'output window, operand 0, single buffered']
    %7 = vsyncpa [#allocation3], 0
    %8 = vsyncpa [#allocation4], 0
    // Predicated region
    $region2: #{tpu_custom_call.1} parent=1 // pred_check
      _
    $region3: #{tpu_custom_call.1} parent=1 // pred_check_branch
      %10 = sbr.rel (0) target = $region5
    $region4: #{tpu_custom_call.1} parent=1 // pred_region
      %s12 = ssub.s32 128, 128
      %13 = vsyncadd [#allocation3], %s12
      %s15 = sshll.u32 [#allocation2], 4
      %s16 = int_to_ptr.vmem [resolvable:$true] %s15
      %18 = dma.hbm_to_vmem [thread:$0]  %s0, 128, %s16, [#allocation3]
    $region5: #{tpu_custom_call.1} parent=1 // pred_fallthru
      _
    // Predicated region
    $region6: #{tpu_custom_call.1} parent=1 // pred_check
      _
    $region7: #{tpu_custom_call.1} parent=1 // pred_check_branch
      %20 = sbr.rel (0) target = $region9
    $region8: #{tpu_custom_call.1} parent=1 // pred_region
      _
    $region9: #{tpu_custom_call.1} parent=1 // pred_fallthru
      _
    // Predicated region
    $region10: #{tpu_custom_call.1} parent=1 // pred_check
      _
    $region11: #{tpu_custom_call.1} parent=1 // pred_check_branch
      %22 = sbr.rel (0) target = $region13
    $region12: #{tpu_custom_call.1} parent=1 // pred_region
      %23 = dma.done [#allocation3], 128
    $region13: #{tpu_custom_call.1} parent=1 // pred_fallthru
      _
    %v24 = vld [vmem:[%s1] sm:$0xff]
    %v25 = vld [vmem:[#allocation2] sm:$0xff]
    %v26 = vadd.f32 %v25, %v24
    %vm27 = vcmask 261120
    %28 = vst.msk [vmem:[#allocation5] sm:$0xff] %vm27, %v26
    %v29 = vld [vmem:[#allocation2] sm:$0xff]
    %31 = vrot.lane.b32.xlu0 %v24, 32
    %v32 = vpop.permute.xlu0 %31
    %v34 = vadd.f32 %v29, %v32
    %vm35 = vcmask 523520
    %36 = vst.msk [vmem:[#allocation5] sm:$0xff] %vm35, %v34
    // Predicated region
    $region14: #{tpu_custom_call.1} parent=1 // pred_check
      _
    $region15: #{tpu_custom_call.1} parent=1 // pred_check_branch
      %38 = sbr.rel (0) target = $region17
    $region16: #{tpu_custom_call.1} parent=1 // pred_region
      %s40 = ssub.s32 128, 128
      %41 = vsyncadd [#allocation4], %s40
      %s43 = sshll.u32 [#allocation5], 4
      %s44 = int_to_ptr.vmem [resolvable:$true] %s43
      %46 = dma.vmem_to_hbm [thread:$0]  %s44, 128, %s2, [#allocation4]
    $region17: #{tpu_custom_call.1} parent=1 // pred_fallthru
      _
    // Predicated region
    $region18: #{tpu_custom_call.1} parent=1 // pred_check
      _
    $region19: #{tpu_custom_call.1} parent=1 // pred_check_branch
      %48 = sbr.rel (0) target = $region21
    $region20: #{tpu_custom_call.1} parent=1 // pred_region
      %49 = dma.done [#allocation4], 128
    $region21: #{tpu_custom_call.1} parent=1 // pred_fallthru
      _
    %50 = vsyncpa [#allocation3], 1
    %51 = vsyncpa [#allocation4], 1

</llo_original>
